<compile_context>
chip_gen: v5e
topology: v5e:2x2
jax: 0.10.0
libtpu: 0.0.40
codegen_flags: <defaults>
</compile_context>

<pallas_src>
import functools

import jax
import jax.numpy as jnp
from jax.experimental import pallas as pl
from jax.experimental.pallas import tpu as pltpu


def _maskiou_partial_kernel(pm_ref, gt_ref,            # inputs  [BR, L]
                            inter_ref, s_ref,          # outputs [1, 8, 128] partials
                            inter_acc, s_acc,          # scratch [8, L] f32
                            *, steps_per_slot, block_rows, total_rows,
                            num_blocks, needs_mask):
    pi = pl.program_id(0)   # parallel slot (megacore split on v7x)
    si = pl.program_id(1)   # sequential reduction step within the slot

    @pl.when(si == 0)
    def _init():
        inter_acc[...] = jnp.zeros_like(inter_acc)
        s_acc[...] = jnp.zeros_like(s_acc)

    def _accumulate(mask_rows):
        pm = pm_ref[...].astype(jnp.float32)
        gt = gt_ref[...].astype(jnp.float32)
        # sigmoid(x) == 0.5*tanh(0.5*x) + 0.5: a single EUP push per vreg.
        p = 0.5 * jnp.tanh(0.5 * pm) + 0.5
        if mask_rows:
            # Zero rows past the end of the slab: covers the partial tail block
            # and any clamped duplicate block from the parallel split.
            blk = pi * steps_per_slot + si          # unclamped row-block id
            rows = blk * block_rows + jax.lax.broadcasted_iota(
                jnp.int32, (block_rows, 1), 0)
            keep = rows < total_rows                # (BR, 1) -> lane broadcast
            p = jnp.where(keep, p, 0.0)
            gt = jnp.where(keep, gt, 0.0)
        groups = block_rows // 8
        inter = (p * gt).reshape(groups, 8, p.shape[-1])
        s = (p + gt).reshape(groups, 8, p.shape[-1])     # fused sum_p + sum_gt
        # Sublane-tile tree reduce to (8, L): aligned vreg adds only (VALU);
        # accumulator ld/st happens once per block instead of once per vreg.
        inter_acc[...] += inter.sum(axis=0)
        s_acc[...] += s.sum(axis=0)

    if needs_mask:
        blk = pi * steps_per_slot + si
        # Only the boundary / duplicate steps pay for the row mask.
        @pl.when(blk < num_blocks - 1)
        def _interior():
            _accumulate(False)

        @pl.when(blk >= num_blocks - 1)
        def _boundary():
            _accumulate(True)
    else:
        _accumulate(False)

    @pl.when(si == pl.num_programs(1) - 1)
    def _finalize():
        inter_ref[...] = jnp.broadcast_to(jnp.sum(inter_acc[...]), inter_ref.shape)
        s_ref[...] = jnp.broadcast_to(jnp.sum(s_acc[...]), s_ref.shape)


def _default_num_parallel():
    # Only v7x has 2 TensorCores per chip; on single-TC v5e/v6e a parallel
    # split just duplicates init/finalize work for zero gain.
    try:
        kind = jax.devices()[0].device_kind.lower()
    except Exception:
        return 1
    return 2 if "v7" in kind else 1


def maskiou_loss(pred_mask, ground_truth_mask, pred_iou, *,
                 block_rows=None, lane_width=None, num_parallel=None,
                 target_block_bytes=1 << 20):
    """pred_mask, ground_truth_mask: [B, 1, H, W]; pred_iou: [B, 1] -> scalar loss."""
    assert pred_mask.shape == ground_truth_mask.shape, \
        'pred_mask and ground_truth_mask should have the same shape.'

    n = int(pred_mask.size)
    # Keep the incoming dtype (bf16 halves DMA bytes); upcast to f32 in-kernel.
    pm = pred_mask.reshape(-1)
    gt = ground_truth_mask.reshape(-1)

    # Lane width: the largest multiple of 128 such that n % (8*L) == 0 so the
    # 2-D view is a free metadata reshape AND R is a multiple of 8 (required
    # by the sublane tree reduce).  Otherwise fall back to L=128 + tail pad.
    if lane_width is None:
        L = None
        for cand in (512, 256, 128):
            if n % (8 * cand) == 0:
                L = cand
                break
        if L is None:
            L = 128
    else:
        assert lane_width % 128 == 0
        L = int(lane_width)

    aligned = 8 * L
    if n % aligned != 0:
        # Rare fallback: pad so the slab holds a whole number of (8, L) tiles.
        # tanh saturates -> p == 0 exactly on the pad; gt pad == 0 -> no effect.
        pad = aligned - (n % aligned)
        pm = jnp.pad(pm, (0, pad), constant_values=-1e4)
        gt = jnp.pad(gt, (0, pad), constant_values=0)
        n_pad = n + pad
    else:
        n_pad = n

    R = n_pad // L
    pm = pm.reshape(R, L)
    gt = gt.reshape(R, L)

    # Row-block size from a byte budget (~1 MiB per input block per buffer).
    itemsize = pm.dtype.itemsize
    if block_rows is None:
        budget = max(8, (target_block_bytes // (L * itemsize)) // 8 * 8)
    else:
        budget = max(8, (int(block_rows) // 8) * 8)
    BR = R if R <= budget else budget

    NB = pl.cdiv(R, BR)                       # number of row blocks
    if num_parallel is None:
        num_parallel = _default_num_parallel()
    P = max(1, min(int(num_parallel), NB))    # megacore split (v7x by default)
    S = pl.cdiv(NB, P)                        # sequential steps per slot

    # Masking needed iff the last row block is partial, or P*S over-covers NB
    # (the clamped index_map then re-reads the last block; the mask zeroes it).
    needs_mask = (NB * BR != R) or (P * S != NB)

    if P * S == NB:
        in_map = lambda pi, si: (pi * S + si, 0)
    else:
        in_map = lambda pi, si: (jnp.minimum(pi * S + si, NB - 1), 0)
    out_map = lambda pi, si: (pi, 0, 0)

    kernel = functools.partial(
        _maskiou_partial_kernel,
        steps_per_slot=S, block_rows=BR, total_rows=R,
        num_blocks=NB, needs_mask=needs_mask)

    part_shape = jax.ShapeDtypeStruct((P, 8, 128), jnp.float32)
    bytes_in = int(pm.size) * itemsize + int(gt.size) * gt.dtype.itemsize
    bytes_out = 2 * P * 8 * 128 * 4

    inter_p, s_p = pl.pallas_call(
        kernel,
        out_shape=[part_shape, part_shape],
        grid_spec=pltpu.PrefetchScalarGridSpec(
            num_scalar_prefetch=0,
            grid=(P, S),
            in_specs=[
                pl.BlockSpec((BR, L), in_map),   # pred_mask slab
                pl.BlockSpec((BR, L), in_map),   # ground-truth slab
            ],
            out_specs=[
                pl.BlockSpec((1, 8, 128), out_map),
                pl.BlockSpec((1, 8, 128), out_map),
            ],
            scratch_shapes=[pltpu.VMEM((8, L), jnp.float32)] * 2,
        ),
        compiler_params=pltpu.CompilerParams(
            # On v7x, verify via xprof that the P axis actually shards across
            # both TensorCores; if not, switch that axis to pltpu.CORE_PARALLEL.
            dimension_semantics=("parallel", "arbitrary"),
            vmem_limit_bytes=32 * 1024 * 1024,
        ),
        cost_estimate=pl.CostEstimate(
            flops=5 * n_pad, transcendentals=n_pad,
            bytes_accessed=bytes_in + bytes_out),
    )(pm, gt)

    # Tiny epilogue (a handful of flops over B values) in plain JAX.
    inter = jnp.sum(inter_p[:, 0, 0])
    s = jnp.sum(s_p[:, 0, 0])                 # = sum(p) + sum(gt)
    union = s - inter
    iou = (inter + 1e-7) / (union + 1e-7)
    diff = iou - pred_iou.astype(jnp.float32)
    return jnp.mean(diff * diff)


def _maskiou_loss_ref(pred_mask, ground_truth_mask, pred_iou):
    p = jax.nn.sigmoid(pred_mask.astype(jnp.float32))
    gt = ground_truth_mask.astype(jnp.float32)
    inter = jnp.sum(p * gt)
    union = jnp.sum(p) + jnp.sum(gt) - inter
    iou = (inter + 1e-7) / (union + 1e-7)
    return jnp.mean((iou - pred_iou.astype(jnp.float32)) ** 2)


if __name__ == "__main__":
    key = jax.random.PRNGKey(0)

    def run_case(B, H, W, dtype=jnp.float32, **kw):
        ks = jax.random.split(jax.random.fold_in(key, B * 100003 + H * 1009 + W), 3)
        pred_mask = jax.random.normal(ks[0], (B, 1, H, W), dtype=jnp.float32).astype(dtype)
        gt_mask = (jax.random.uniform(ks[1], (B, 1, H, W)) > 0.5).astype(dtype)
        pred_iou = jax.random.uniform(ks[2], (B, 1), dtype=jnp.float32)
        loss = maskiou_loss(pred_mask, gt_mask, pred_iou, **kw)
        jax.block_until_ready(loss)
        ref = _maskiou_loss_ref(pred_mask, gt_mask, pred_iou)
        assert jnp.allclose(loss, ref, rtol=5e-4, atol=1e-6), \
            (B, H, W, dtype, kw, float(loss), float(ref))

    # Primary small case from the module spec (single block, tiny tail pad).
    run_case(2, 16, 16)
    # Multi-step reduction, no mask (exercises the accumulator carry).
    run_case(2, 128, 128, block_rows=32)
    # Partial tail row block (exercises the gated boundary mask).
    run_case(2, 32, 80, block_rows=16, lane_width=128, num_parallel=1)
    # Parallel split over-covers NB (clamped index_map + duplicate-block mask).
    run_case(2, 32, 80, block_rows=16, lane_width=128, num_parallel=2)
    # Lane-misaligned element count (tail-pad fallback).
    run_case(2, 15, 15)
    # bf16 masks from the producer (halved HBM bytes; upcast happens in VMEM).
    run_case(2, 64, 64, dtype=jnp.bfloat16)

    print("KERNEL_OK")
</pallas_src>

<mosaic_0001>
module attributes {stable_mosaic.version = 11 : i64} {
  func.func @_maskiou_partial_kernel(%arg0: i32, %arg1: i32, %arg2: memref<8x128xf32, #tpu.memory_space<vmem>>, %arg3: memref<8x128xf32, #tpu.memory_space<vmem>>, %arg4: memref<1x8x128xf32, #tpu.memory_space<vmem>>, %arg5: memref<1x8x128xf32, #tpu.memory_space<vmem>>, %arg6: memref<8x128xf32, #tpu.memory_space<vmem>>, %arg7: memref<8x128xf32, #tpu.memory_space<vmem>>) attributes {dimension_semantics = [#tpu.dimension_semantics<parallel>, #tpu.dimension_semantics<arbitrary>], iteration_bounds = array<i64: 1, 1>, scalar_prefetch = 0 : i64, scratch_operands = 2 : i64, tpu.core_type = #tpu.core_type<tc>, window_params = [{transform_indices = @transform_0, window_bounds = array<i64: 8, 128>}, {transform_indices = @transform_1, window_bounds = array<i64: 8, 128>}, {transform_indices = @transform_2, window_bounds = array<i64: 1, 8, 128>}, {transform_indices = @transform_3, window_bounds = array<i64: 1, 8, 128>}]} {
    %c0_i32 = arith.constant 0 : i32
    %0 = arith.cmpi eq, %arg1, %c0_i32 : i32
    %1 = arith.extui %0 : i1 to i32
    %c0_i32_0 = arith.constant 0 : i32
    %2 = arith.cmpi ne, %1, %c0_i32_0 : i32
    scf.if %2 {
      %cst_18 = arith.constant 0.000000e+00 : f32
      %27 = vector.broadcast %cst_18 : f32 to vector<8x128xf32>
      %c0_19 = arith.constant 0 : index
      %c0_20 = arith.constant 0 : index
      %28 = vector.load %arg6[%c0_19, %c0_20] : memref<8x128xf32, #tpu.memory_space<vmem>>, vector<8x128xf32>
      tpu.vector_store %arg6[%c0_19, %c0_20], %27 {strides = array<i32>} : memref<8x128xf32, #tpu.memory_space<vmem>>, vector<8x128xf32>,
      %cst_21 = arith.constant 0.000000e+00 : f32
      %29 = vector.broadcast %cst_21 : f32 to vector<8x128xf32>
      %c0_22 = arith.constant 0 : index
      %c0_23 = arith.constant 0 : index
      %30 = vector.load %arg7[%c0_22, %c0_23] : memref<8x128xf32, #tpu.memory_space<vmem>>, vector<8x128xf32>
      tpu.vector_store %arg7[%c0_22, %c0_23], %29 {strides = array<i32>} : memref<8x128xf32, #tpu.memory_space<vmem>>, vector<8x128xf32>,
    } else {
    }
    %c0 = arith.constant 0 : index
    %c0_1 = arith.constant 0 : index
    %3 = vector.load %arg2[%c0, %c0_1] : memref<8x128xf32, #tpu.memory_space<vmem>>, vector<8x128xf32>
    %c0_2 = arith.constant 0 : index
    %c0_3 = arith.constant 0 : index
    %4 = vector.load %arg3[%c0_2, %c0_3] : memref<8x128xf32, #tpu.memory_space<vmem>>, vector<8x128xf32>
    %cst = arith.constant 5.000000e-01 : f32
    %5 = vector.broadcast %cst : f32 to vector<8x128xf32>
    %6 = arith.mulf %5, %3 : vector<8x128xf32>
    %7 = math.tanh %6 : vector<8x128xf32>
    %cst_4 = arith.constant 5.000000e-01 : f32
    %8 = vector.broadcast %cst_4 : f32 to vector<8x128xf32>
    %9 = arith.mulf %8, %7 : vector<8x128xf32>
    %cst_5 = arith.constant 5.000000e-01 : f32
    %10 = vector.broadcast %cst_5 : f32 to vector<8x128xf32>
    %11 = arith.addf %9, %10 : vector<8x128xf32>
    %12 = arith.mulf %11, %4 : vector<8x128xf32>
    %13 = vector.shape_cast %12 : vector<8x128xf32> to vector<1x8x128xf32>
    %14 = arith.addf %11, %4 : vector<8x128xf32>
    %15 = vector.shape_cast %14 : vector<8x128xf32> to vector<1x8x128xf32>
    %c0_6 = arith.constant 0 : index
    %c0_7 = arith.constant 0 : index
    %16 = vector.load %arg6[%c0_6, %c0_7] : memref<8x128xf32, #tpu.memory_space<vmem>>, vector<8x128xf32>
    %cst_8 = arith.constant dense<0.000000e+00> : vector<8x128xf32>
    %17 = vector.multi_reduction <add>, %13, %cst_8 [0] : vector<1x8x128xf32> to vector<8x128xf32>
    %18 = arith.addf %16, %17 : vector<8x128xf32>
    %c0_9 = arith.constant 0 : index
    %c0_10 = arith.constant 0 : index
    %19 = vector.load %arg6[%c0_9, %c0_10] : memref<8x128xf32, #tpu.memory_space<vmem>>, vector<8x128xf32>
    tpu.vector_store %arg6[%c0_9, %c0_10], %18 {strides = array<i32>} : memref<8x128xf32, #tpu.memory_space<vmem>>, vector<8x128xf32>,
    %c0_11 = arith.constant 0 : index
    %c0_12 = arith.constant 0 : index
    %20 = vector.load %arg7[%c0_11, %c0_12] : memref<8x128xf32, #tpu.memory_space<vmem>>, vector<8x128xf32>
    %cst_13 = arith.constant dense<0.000000e+00> : vector<8x128xf32>
    %21 = vector.multi_reduction <add>, %15, %cst_13 [0] : vector<1x8x128xf32> to vector<8x128xf32>
    %22 = arith.addf %20, %21 : vector<8x128xf32>
    %c0_14 = arith.constant 0 : index
    %c0_15 = arith.constant 0 : index
    %23 = vector.load %arg7[%c0_14, %c0_15] : memref<8x128xf32, #tpu.memory_space<vmem>>, vector<8x128xf32>
    tpu.vector_store %arg7[%c0_14, %c0_15], %22 {strides = array<i32>} : memref<8x128xf32, #tpu.memory_space<vmem>>, vector<8x128xf32>,
    %c0_i32_16 = arith.constant 0 : i32
    %24 = arith.cmpi eq, %arg1, %c0_i32_16 : i32
    %25 = arith.extui %24 : i1 to i32
    %c0_i32_17 = arith.constant 0 : i32
    %26 = arith.cmpi ne, %25, %c0_i32_17 : i32
    scf.if %26 {
      %c0_18 = arith.constant 0 : index
      %c0_19 = arith.constant 0 : index
      %27 = vector.load %arg6[%c0_18, %c0_19] : memref<8x128xf32, #tpu.memory_space<vmem>>, vector<8x128xf32>
      %28 = vector.shape_cast %27 : vector<8x128xf32> to vector<1x8x128xf32>
      %cst_20 = arith.constant dense<0.000000e+00> : vector<1xf32>
      %29 = vector.multi_reduction <add>, %28, %cst_20 [1, 2] : vector<1x8x128xf32> to vector<1xf32>
      %30 = vector.shape_cast %29 : vector<1xf32> to vector<1x1x1xf32>
      %31 = vector.extract %30[0, 0, 0] : f32 from vector<1x1x1xf32>
      %32 = vector.broadcast %31 : f32 to vector<1x8x128xf32>
      %c0_21 = arith.constant 0 : index
      %c0_22 = arith.constant 0 : index
      %c0_23 = arith.constant 0 : index
      %33 = vector.load %arg4[%c0_21, %c0_22, %c0_23] : memref<1x8x128xf32, #tpu.memory_space<vmem>>, vector<1x8x128xf32>
      tpu.vector_store %arg4[%c0_21, %c0_22, %c0_23], %32 {strides = array<i32>} : memref<1x8x128xf32, #tpu.memory_space<vmem>>, vector<1x8x128xf32>,
      %c0_24 = arith.constant 0 : index
      %c0_25 = arith.constant 0 : index
      %34 = vector.load %arg7[%c0_24, %c0_25] : memref<8x128xf32, #tpu.memory_space<vmem>>, vector<8x128xf32>
      %35 = vector.shape_cast %34 : vector<8x128xf32> to vector<1x8x128xf32>
      %cst_26 = arith.constant dense<0.000000e+00> : vector<1xf32>
      %36 = vector.multi_reduction <add>, %35, %cst_26 [1, 2] : vector<1x8x128xf32> to vector<1xf32>
      %37 = vector.shape_cast %36 : vector<1xf32> to vector<1x1x1xf32>
      %38 = vector.extract %37[0, 0, 0] : f32 from vector<1x1x1xf32>
      %39 = vector.broadcast %38 : f32 to vector<1x8x128xf32>
      %c0_27 = arith.constant 0 : index
      %c0_28 = arith.constant 0 : index
      %c0_29 = arith.constant 0 : index
      %40 = vector.load %arg5[%c0_27, %c0_28, %c0_29] : memref<1x8x128xf32, #tpu.memory_space<vmem>>, vector<1x8x128xf32>
      tpu.vector_store %arg5[%c0_27, %c0_28, %c0_29], %39 {strides = array<i32>} : memref<1x8x128xf32, #tpu.memory_space<vmem>>, vector<1x8x128xf32>,
    } else {
    }
    return
  }
  func.func @transform_0(%arg0: i32, %arg1: i32) -> (i32, i32) {
    %c1_i32 = arith.constant 1 : i32
    %0 = arith.muli %arg0, %c1_i32 : i32
    %1 = arith.addi %0, %arg1 : i32
    %c0_i32 = arith.constant 0 : i32
    %c0_i32_0 = arith.constant 0 : i32
    return %1, %c0_i32 : i32, i32
  }
  func.func @transform_1(%arg0: i32, %arg1: i32) -> (i32, i32) {
    %c1_i32 = arith.constant 1 : i32
    %0 = arith.muli %arg0, %c1_i32 : i32
    %1 = arith.addi %0, %arg1 : i32
    %c0_i32 = arith.constant 0 : i32
    %c0_i32_0 = arith.constant 0 : i32
    return %1, %c0_i32 : i32, i32
  }
  func.func @transform_2(%arg0: i32, %arg1: i32) -> (i32, i32, i32) {
    %c0_i32 = arith.constant 0 : i32
    %c0_i32_0 = arith.constant 0 : i32
    %c0_i32_1 = arith.constant 0 : i32
    return %arg0, %c0_i32, %c0_i32_0 : i32, i32, i32
  }
  func.func @transform_3(%arg0: i32, %arg1: i32) -> (i32, i32, i32) {
    %c0_i32 = arith.constant 0 : i32
    %c0_i32_0 = arith.constant 0 : i32
    %c0_i32_1 = arith.constant 0 : i32
    return %arg0, %c0_i32, %c0_i32_0 : i32, i32, i32
  }
}

</mosaic_0001>

<llo_original>
// kernel: tpu_custom_call.1
$region0: #{tpu_custom_call.1}
  #allocation0 [shape = 'u32[]', space=smem, size = 0x4, offset = 0x4, fixed_abs, tag = 'smem constant byte address 0x4 - core index']
  #allocation1 [shape = 'u32[72,128]{1,0:T(1,128)}', space=vmem, size = 0x9000, scoped, tag = 'internal scratch']
  #allocation2 [shape = 'f32[8,128]{1,0:T(8,128)}', space=vmem, size = 0x1000, scoped, tag = 'scratch operand']
  #allocation3 [shape = 'f32[8,128]{1,0:T(8,128)}', space=vmem, size = 0x1000, scoped, tag = 'scratch operand']
  %s0 = inlined_call_operand.hbm [shape: f32[8,128], index: 0, kind: input, shape index: {}]
  %s1 = inlined_call_operand.hbm [shape: f32[8,128], index: 1, kind: input, shape index: {}]
  %s2 = inlined_call_operand.hbm [shape: f32[1,8,128], index: 2, kind: output, shape index: {0}]
  %s3 = inlined_call_operand.hbm [shape: f32[1,8,128], index: 3, kind: output, shape index: {1}]
  %4 = xla_tuple %s2, %s3
  %s5 = sld [smem:[#allocation0]]
  $region42: #{tpu_custom_call.1} parent=0
    _
  %s7 = ssub.s32 1, %s5
  %s8 = scalar_select 0, %s7, %s5
  $region1: #{tpu_custom_call.1} parent=0
    #allocation4 [shape = 'u8[4096]{0}', space=vmem, size = 0x1000, scoped, tag = 'input window, operand 0, single buffered']
    #allocation5 [shape = 's32[1]{0}', space=sflag, size = 0x4, scoped, tag = 'scoped memory for tpu_custom_call.1']
    #allocation6 [shape = 's32[1]{0}', space=sflag, size = 0x4, scoped, tag = 'scoped memory for tpu_custom_call.1']
    #allocation7 [shape = 'u8[4096]{0}', space=vmem, size = 0x1000, scoped, tag = 'input window, operand 1, single buffered']
    #allocation8 [shape = 's32[1]{0}', space=sflag, size = 0x4, scoped, tag = 'scoped memory for tpu_custom_call.1']
    #allocation9 [shape = 'u8[4096]{0}', space=vmem, size = 0x1000, scoped, tag = 'output window, operand 0, single buffered']
    #allocation10 [shape = 'u8[4096]{0}', space=vmem, size = 0x1000, scoped, tag = 'output window, operand 1, single buffered']
    #allocation11 [shape = 's32[1]{0}', space=sflag, size = 0x4, scoped, tag = 'scoped memory for tpu_custom_call.1']
    %9 = vsyncpa [#allocation5], 0
    %10 = vsyncpa [#allocation8], 0
    %11 = vsyncpa [#allocation6], 0
    %12 = vsyncpa [#allocation11], 0
    // Predicated region
    $region2: #{tpu_custom_call.1} parent=1 // pred_check
      _
    $region3: #{tpu_custom_call.1} parent=1 // pred_check_branch
      %14 = sbr.rel (0) target = $region5
    $region4: #{tpu_custom_call.1} parent=1 // pred_region
      %s15 = sadd.s32 0, 0
      %17 = vsyncadd [#allocation5], 0
      %s18 = smul.addr %s15, 8
      %s19 = scalar_lea.hbm %s0, %s18
      %s21 = sshll.u32 %s19, 4
      %s22 = int_to_ptr.hbm [resolvable:$true] %s21
      %s23 = sshll.u32 [#allocation4], 4
      %s24 = int_to_ptr.vmem [resolvable:$true] %s23
      %26 = dma.hbm_to_vmem [thread:$0]  %s22, 128, %s24, [#allocation5]
    $region5: #{tpu_custom_call.1} parent=1 // pred_fallthru
      _
    // Predicated region
    $region6: #{tpu_custom_call.1} parent=1 // pred_check
      _
    $region7: #{tpu_custom_call.1} parent=1 // pred_check_branch
      %28 = sbr.rel (0) target = $region9
    $region8: #{tpu_custom_call.1} parent=1 // pred_region
      %s29 = sadd.s32 0, 0
      %31 = vsyncadd [#allocation8], 0
      %s32 = smul.addr %s29, 8
      %s33 = scalar_lea.hbm %s1, %s32
      %s35 = sshll.u32 %s33, 4
      %s36 = int_to_ptr.hbm [resolvable:$true] %s35
      %s37 = sshll.u32 [#allocation7], 4
      %s38 = int_to_ptr.vmem [resolvable:$true] %s37
      %40 = dma.hbm_to_vmem [thread:$0]  %s36, 128, %s38, [#allocation8]
    $region9: #{tpu_custom_call.1} parent=1 // pred_fallthru
      _
    // Predicated region
    $region10: #{tpu_custom_call.1} parent=1 // pred_check
      _
    $region11: #{tpu_custom_call.1} parent=1 // pred_check_branch
      %42 = sbr.rel (0) target = $region13
    $region12: #{tpu_custom_call.1} parent=1 // pred_region
      %44 = dma.done [#allocation5], 128
    $region13: #{tpu_custom_call.1} parent=1 // pred_fallthru
      _
    // Predicated region
    $region14: #{tpu_custom_call.1} parent=1 // pred_check
      _
    $region15: #{tpu_custom_call.1} parent=1 // pred_check_branch
      %46 = sbr.rel (0) target = $region17
    $region16: #{tpu_custom_call.1} parent=1 // pred_region
      %48 = dma.done [#allocation8], 128
    $region17: #{tpu_custom_call.1} parent=1 // pred_fallthru
      _
    %s49 = sadd.s32 0, 0
    %s50 = sadd.s32 0, 0
    %p51 = scmp.eq.s32.totalorder 0, 0
    // Predicated region
    $region18: #{tpu_custom_call.1} parent=1 // pred_check
      %p52 = pneg %p51
    $region19: #{tpu_custom_call.1} parent=1 // pred_check_branch
      %54 = sbr.rel (%p52) target = $region21
    $region20: #{tpu_custom_call.1} parent=1 // pred_region
      %55 = vst [vmem:[#allocation2] sm:$0xff] 0.0
      %56 = vst [vmem:[#allocation3] sm:$0xff] 0.0
    $region21: #{tpu_custom_call.1} parent=1 // pred_fallthru
      _
    %v57 = vld [vmem:[#allocation4] sm:$0xff]
    %v58 = vld [vmem:[#allocation7] sm:$0xff]
    %v59 = vmul.f32 %v57, 0.5
    %v60 = vtanh.pop %v59
    %v61 = vmul.f32 %v60, 0.5
    %v62 = vadd.f32 %v61, 0.5
    %v63 = vmul.f32 %v62, %v58
    %v64 = vadd.f32 %v62, %v58
    %v65 = vld [vmem:[#allocation2] sm:$0xff]
    %v66 = vadd.f32 %v63, 0.0
    %v67 = vadd.f32 %v65, %v66
    %68 = vst [vmem:[#allocation2] sm:$0xff] %v67
    %v69 = vld [vmem:[#allocation3] sm:$0xff]
    %v70 = vadd.f32 %v64, 0.0
    %v71 = vadd.f32 %v69, %v70
    %72 = vst [vmem:[#allocation3] sm:$0xff] %v71
    // Predicated region
    $region22: #{tpu_custom_call.1} parent=1 // pred_check
      %p73 = pneg %p51
    $region23: #{tpu_custom_call.1} parent=1 // pred_check_branch
      %75 = sbr.rel (%p73) target = $region25
    $region24: #{tpu_custom_call.1} parent=1 // pred_region
      %v76 = vld [vmem:[#allocation2] sm:$0xff]
      %77 = vadd.xlane.f32.xlu0 %v76
      %v78 = vpop.xlane.xlu0 %77
      %v79 = vrot.slane %v78, 4
      %v80 = vadd.f32 %v78, %v79
      %v81 = vrot.slane %v80, 2
      %v82 = vadd.f32 %v80, %v81
      %v83 = vrot.slane %v82, 1
      %v84 = vadd.f32 %v82, %v83
      %s85 = vtos %v84
      %v86 = vstv %s85
      %87 = vst [vmem:[#allocation9] sm:$0xff] %v86
      %v88 = vld [vmem:[#allocation3] sm:$0xff]
      %89 = vadd.xlane.f32.xlu0 %v88
      %v90 = vpop.xlane.xlu0 %89
      %v91 = vrot.slane %v90, 4
      %v92 = vadd.f32 %v90, %v91
      %v93 = vrot.slane %v92, 2
      %v94 = vadd.f32 %v92, %v93
      %v95 = vrot.slane %v94, 1
      %v96 = vadd.f32 %v94, %v95
      %s97 = vtos %v96
      %v98 = vstv %s97
      %99 = vst [vmem:[#allocation10] sm:$0xff] %v98
    $region25: #{tpu_custom_call.1} parent=1 // pred_fallthru
      _
    // Predicated region
    $region26: #{tpu_custom_call.1} parent=1 // pred_check
      _
    $region27: #{tpu_custom_call.1} parent=1 // pred_check_branch
      %101 = sbr.rel (0) target = $region29
    $region28: #{tpu_custom_call.1} parent=1 // pred_region
      %103 = vsyncadd [#allocation6], 0
      %s105 = sshll.u32 [#allocation9], 4
      %s106 = int_to_ptr.vmem [resolvable:$true] %s105
      %s107 = sshll.u32 %s2, 4
      %s108 = int_to_ptr.hbm [resolvable:$true] %s107
      %110 = dma.vmem_to_hbm [thread:$0]  %s106, 128, %s108, [#allocation6]
    $region29: #{tpu_custom_call.1} parent=1 // pred_fallthru
      _
    // Predicated region
    $region30: #{tpu_custom_call.1} parent=1 // pred_check
      _
    $region31: #{tpu_custom_call.1} parent=1 // pred_check_branch
      %112 = sbr.rel (0) target = $region33
    $region32: #{tpu_custom_call.1} parent=1 // pred_region
      %114 = vsyncadd [#allocation11], 0
      %s116 = sshll.u32 [#allocation10], 4
      %s117 = int_to_ptr.vmem [resolvable:$true] %s116
      %s118 = sshll.u32 %s3, 4
      %s119 = int_to_ptr.hbm [resolvable:$true] %s118
      %121 = dma.vmem_to_hbm [thread:$0]  %s117, 128, %s119, [#allocation11]
    $region33: #{tpu_custom_call.1} parent=1 // pred_fallthru
      _
    // Predicated region
    $region34: #{tpu_custom_call.1} parent=1 // pred_check
      _
    $region35: #{tpu_custom_call.1} parent=1 // pred_check_branch
      %123 = sbr.rel (0) target = $region37
    $region36: #{tpu_custom_call.1} parent=1 // pred_region
      %125 = dma.done [#allocation6], 128
    $region37: #{tpu_custom_call.1} parent=1 // pred_fallthru
      _
    // Predicated region
    $region38: #{tpu_custom_call.1} parent=1 // pred_check
      _
    $region39: #{tpu_custom_call.1} parent=1 // pred_check_branch
      %127 = sbr.rel (0) target = $region41
    $region40: #{tpu_custom_call.1} parent=1 // pred_region
      %129 = dma.done [#allocation11], 128
    $region41: #{tpu_custom_call.1} parent=1 // pred_fallthru
      _
    %130 = vsyncpa [#allocation5], 1
    %131 = vsyncpa [#allocation8], 1
    %132 = vsyncpa [#allocation6], 1
    %133 = vsyncpa [#allocation11], 1

</llo_original>
